<compile_context>
chip_gen: v7x
topology: tpu7x:2x2x1
jax: 0.10.0
libtpu: 0.0.40
codegen_flags: <defaults>
</compile_context>

<pallas_src>
import jax
import jax.numpy as jnp
from jax import lax
from jax.experimental import pallas as pl
from jax.experimental.pallas import tpu as pltpu

# ----------------------- small synthetic config -----------------------
C_IN, H_SP, W_SP = 4, 16, 16          # image channels / spatial
HW = H_SP * W_SP
SEQ = 8                               # question length
VOCAB = 32                            # question vocab
EMB_D = 32                            # fused feature dim
HID = 32                              # MLP hidden dim
NUM_CLASSES = 16                      # encoder output dim (proto feature dim)

WAY = 4
SHOT = 2
QUERY_PER_WAY = 4
B_PRETRAIN = 8

# ---- packed-parameter layout: one VMEM operand, 8-row-aligned slots ----
P_COLS = 32                            # = max(EMB_D, HID); narrower params padded


def _align8(x):
    return (x + 7) & ~7


R_EMB = 0                              # [VOCAB, EMB_D]
R_WIMG = _align8(R_EMB + VOCAB)        # [C_IN, EMB_D]
R_WH = _align8(R_WIMG + C_IN)          # [EMB_D, HID]
R_BH = _align8(R_WH + EMB_D)           # [1, HID]
R_WOUT = _align8(R_BH + 1)             # [HID, NUM_CLASSES]
R_BOUT = _align8(R_WOUT + HID)         # [1, NUM_CLASSES]
P_ROWS = _align8(R_BOUT + 1)           # 120 rows x 32 cols f32 = 15 KiB


def _vmem():
    return pl.BlockSpec(memory_space=pltpu.MemorySpace.VMEM)


def _unpack_params(p):
    """Static, 8-row-aligned slices of the packed parameter block."""
    emb = p[R_EMB:R_EMB + VOCAB, :EMB_D]
    w_img = p[R_WIMG:R_WIMG + C_IN, :EMB_D]
    w_h = p[R_WH:R_WH + EMB_D, :HID]
    b_h = p[R_BH:R_BH + 1, :HID]
    w_out = p[R_WOUT:R_WOUT + HID, :NUM_CLASSES]
    b_out = p[R_BOUT:R_BOUT + 1, :NUM_CLASSES]
    return emb, w_img, w_h, b_h, w_out, b_out


# ----------------------- shared in-kernel encoder -----------------------
def _encode(img2, ids, emb, w_img, w_h, b_h, w_out, b_out):
    """Synthetic VQA encoder, fully in-kernel.

    img2 : [B, C*H*W] f32   (NCHW flattened; 256-lane-aligned channel chunks)
    ids  : [B, S]     i32   question token ids
    emb  : [V, D]     f32   embedding table (VMEM-resident, 4 KB)
    """
    B = img2.shape[0]
    S = ids.shape[1]
    V = emb.shape[0]

    # Image branch: per-channel spatial mean = aligned lane-slice reductions
    # (XLU slot), contraction over C folded as C broadcast-FMA terms (VPU).
    # No MXU weight staging at all on this path (was a K=1024 matmul before).
    inv_hw = 1.0 / HW
    img_feat = jnp.zeros((B, EMB_D), jnp.float32)
    for c in range(C_IN):                                 # static, C=4
        pooled = jnp.sum(img2[:, c * HW:(c + 1) * HW], axis=-1,
                         keepdims=True) * inv_hw          # [B, 1]
        img_feat = img_feat + pooled * w_img[c:c + 1, :]  # [B, D]

    # Question branch: embedding lookup as a one-hot matmul; the sequence
    # mean is folded into the one-hot counts (all 2-D, no gather op).
    iota_v = lax.broadcasted_iota(jnp.int32, (B, V), 1)
    counts = jnp.zeros((B, V), jnp.float32)
    for s in range(S):                                    # static, unrolled
        counts = counts + (iota_v == ids[:, s:s + 1]).astype(jnp.float32)
    counts = counts * (1.0 / S)
    que_feat = jnp.dot(counts, emb, preferred_element_type=jnp.float32)

    # multiplicative fusion -> ReLU MLP -> logits
    fused = img_feat * que_feat
    hidden = jnp.maximum(
        jnp.dot(fused, w_h, preferred_element_type=jnp.float32) + b_h, 0.0)
    return jnp.dot(hidden, w_out, preferred_element_type=jnp.float32) + b_out


# ----------------------- kernel #1: plain forward -----------------------
def encoder_kernel(params_ref, img_ref, ids_ref, out_ref):
    emb, w_img, w_h, b_h, w_out, b_out = _unpack_params(params_ref[...])
    out_ref[...] = _encode(img_ref[...], ids_ref[...],
                           emb, w_img, w_h, b_h, w_out, b_out)


# ------------- kernel #2: fully fused forward_proto path -------------
def _make_proto_kernel(shot, way):
    def proto_kernel(params_ref, img_s_ref, ids_s_ref, img_q_ref, ids_q_ref,
                     dist_ref, sim_ref):
        pk = _unpack_params(params_ref[...])
        shot_logits = _encode(img_s_ref[...], ids_s_ref[...], *pk)  # [S*W, K]
        query = _encode(img_q_ref[...], ids_q_ref[...], *pk)        # [Q,   K]

        # proto = reshape(shot, way, -1).mean(0), as static-slice sums.
        # NOTE: assumes data_shot rows are ordered [shot, way] as in the
        # reference proto.reshape(shot, way, -1).mean(dim=0).
        proto = shot_logits[0:way]
        for s in range(1, shot):
            proto = proto + shot_logits[s * way:(s + 1) * way]
        proto = proto * (1.0 / shot)                                 # [way, K]

        # euclidean_metric: -(|q|^2 + |p|^2 - 2 q.p), transpose-free.
        qp = lax.dot_general(query, proto, (((1,), (1,)), ((), ())),
                             preferred_element_type=jnp.float32)     # [Q, way]
        q_sq = jnp.sum(query * query, axis=-1, keepdims=True)        # [Q, 1]
        pp = proto * proto
        p_sq = jnp.sum(pp, axis=-1, keepdims=True)                   # [way, 1]
        # broadcast |p|^2 to [Q, way] with a trivial K=1 contraction
        # (reuses the sum already needed for the cosine head).
        ones_q = jnp.ones((query.shape[0], 1), jnp.float32)
        p_sq_row = lax.dot_general(ones_q, p_sq, (((1,), (1,)), ((), ())),
                                   preferred_element_type=jnp.float32)
        dist_ref[...] = 2.0 * qp - q_sq - p_sq_row

        # cosine head: q @ normalize(p, p=2, dim=-1).T  (rsqrt -> EUP slot)
        inv_norm = lax.rsqrt(jnp.maximum(p_sq, 1e-24))               # [way, 1]
        sim_ref[...] = lax.dot_general(query, proto * inv_norm,
                                       (((1,), (1,)), ((), ())),
                                       preferred_element_type=jnp.float32)
    return proto_kernel


# ----------------------- module-level wrappers -----------------------
def classifier_forward(params_packed, img, que, img_id):
    """Classifier.forward: logits = encoder(img, que, img_id)."""
    del img_id  # carried through the reference API but unused in compute
    B = img.shape[0]
    img2 = img.reshape(B, C_IN * HW).astype(jnp.float32)   # NCHW flatten
    ids = que.astype(jnp.int32)

    tb = min(B, 128)                                       # batch tile
    grid = (pl.cdiv(B, tb),)
    return pl.pallas_call(
        encoder_kernel,
        out_shape=jax.ShapeDtypeStruct((B, NUM_CLASSES), jnp.float32),
        grid_spec=pltpu.PrefetchScalarGridSpec(
            num_scalar_prefetch=0,
            grid=grid,
            in_specs=[
                pl.BlockSpec((P_ROWS, P_COLS), lambda i: (0, 0)),   # params
                pl.BlockSpec((tb, C_IN * HW), lambda i: (i, 0)),    # images
                pl.BlockSpec((tb, SEQ), lambda i: (i, 0)),          # questions
            ],
            out_specs=pl.BlockSpec((tb, NUM_CLASSES), lambda i: (i, 0)),
        ),
        compiler_params=pltpu.CompilerParams(
            dimension_semantics=("parallel",)),
    )(params_packed, img2, ids)


def classifier_forward_proto(params_packed, data_shot, data_query, que_shot,
                             que_query, img_id_shot, img_id_query, way):
    """Classifier.forward_proto, fused into a single pallas_call."""
    del img_id_shot, img_id_query
    n_shot = data_shot.shape[0]
    n_query = data_query.shape[0]
    shot = n_shot // way
    img_s = data_shot.reshape(n_shot, C_IN * HW).astype(jnp.float32)
    img_q = data_query.reshape(n_query, C_IN * HW).astype(jnp.float32)
    ids_s = que_shot.astype(jnp.int32)
    ids_q = que_query.astype(jnp.int32)

    # TODO(synk): when evaluating many episodes per step, add a leading
    # episode grid axis + per-episode BlockSpecs (dimension_semantics parallel)
    # to amortize launch overhead / use v7x's second TensorCore.
    dist, sim = pl.pallas_call(
        _make_proto_kernel(shot, way),
        out_shape=(jax.ShapeDtypeStruct((n_query, way), jnp.float32),
                   jax.ShapeDtypeStruct((n_query, way), jnp.float32)),
        in_specs=[_vmem()] * 5,
        out_specs=(_vmem(), _vmem()),
    )(params_packed, img_s, ids_s, img_q, ids_q)
    return dist, sim


# ----------------------- deterministic parameter init -----------------------
def init_params(key):
    ks = jax.random.split(key, 4)
    scale = 0.05
    emb = scale * jax.random.normal(ks[0], (VOCAB, EMB_D), jnp.float32)
    w_img = scale * jax.random.normal(ks[1], (C_IN, EMB_D), jnp.float32)
    w_h = scale * jax.random.normal(ks[2], (EMB_D, HID), jnp.float32)
    w_out = scale * jax.random.normal(ks[3], (HID, NUM_CLASSES), jnp.float32)
    # single packed f32 parameter buffer; bias rows stay zero (zero-init).
    packed = jnp.zeros((P_ROWS, P_COLS), jnp.float32)
    packed = packed.at[R_EMB:R_EMB + VOCAB, :EMB_D].set(emb)
    packed = packed.at[R_WIMG:R_WIMG + C_IN, :EMB_D].set(w_img)
    packed = packed.at[R_WH:R_WH + EMB_D, :HID].set(w_h)
    packed = packed.at[R_WOUT:R_WOUT + HID, :NUM_CLASSES].set(w_out)
    return packed


if __name__ == "__main__":
    key = jax.random.PRNGKey(0)
    k_par, k_img, k_que, k_imgq, k_queq, k_img2 = jax.random.split(key, 6)
    params_packed = init_params(k_par)

    # ---- plain forward (pretrain classification path) ----
    img = jax.random.normal(k_img, (B_PRETRAIN, C_IN, H_SP, W_SP), jnp.float32)
    que = jax.random.randint(k_que, (B_PRETRAIN, SEQ), 0, VOCAB)
    img_id = jnp.arange(B_PRETRAIN, dtype=jnp.int32)
    logits = classifier_forward(params_packed, img, que, img_id)
    jax.block_until_ready(logits)
    assert logits.shape == (B_PRETRAIN, NUM_CLASSES)

    # ---- forward_proto (few-shot path, single fused kernel) ----
    n_shot = SHOT * WAY
    n_query = WAY * QUERY_PER_WAY
    data_shot = jax.random.normal(k_imgq, (n_shot, C_IN, H_SP, W_SP),
                                  jnp.float32)
    data_query = jax.random.normal(k_img2, (n_query, C_IN, H_SP, W_SP),
                                   jnp.float32)
    que_shot = jax.random.randint(k_queq, (n_shot, SEQ), 0, VOCAB)
    que_query = jax.random.randint(k_que, (n_query, SEQ), 0, VOCAB)
    img_id_shot = jnp.arange(n_shot, dtype=jnp.int32)
    img_id_query = jnp.arange(n_query, dtype=jnp.int32)

    logits_dist, logits_sim = classifier_forward_proto(
        params_packed, data_shot, data_query, que_shot, que_query,
        img_id_shot, img_id_query, WAY)
    jax.block_until_ready((logits_dist, logits_sim))
    assert logits_dist.shape == (n_query, WAY)
    assert logits_sim.shape == (n_query, WAY)

    print("KERNEL_OK")
</pallas_src>

<mosaic_0001>
module attributes {stable_mosaic.version = 11 : i64} {
  func.func @encoder_kernel(%arg0: i32, %arg1: memref<120x32xf32, #tpu.memory_space<vmem>>, %arg2: memref<8x1024xf32, #tpu.memory_space<vmem>>, %arg3: memref<8x8xi32, #tpu.memory_space<vmem>>, %arg4: memref<8x16xf32, #tpu.memory_space<vmem>>) attributes {dimension_semantics = [#tpu.dimension_semantics<parallel>], iteration_bounds = array<i64: 1>, scalar_prefetch = 0 : i64, scratch_operands = 0 : i64, tpu.core_type = #tpu.core_type<tc>, window_params = [{pipeline_mode = #tpu.pipeline_mode<synchronous>, transform_indices = @transform_0, window_bounds = array<i64: 120, 32>}, {transform_indices = @transform_1, window_bounds = array<i64: 8, 1024>}, {transform_indices = @transform_2, window_bounds = array<i64: 8, 8>}, {transform_indices = @transform_3, window_bounds = array<i64: 8, 16>}]} {
    %c0 = arith.constant 0 : index
    %c0_0 = arith.constant 0 : index
    %0 = vector.load %arg1[%c0, %c0_0] : memref<120x32xf32, #tpu.memory_space<vmem>>, vector<120x32xf32>
    %1 = vector.extract_strided_slice %0 {offsets = [0, 0], sizes = [32, 32], strides = [1, 1]} : vector<120x32xf32> to vector<32x32xf32>
    %2 = vector.extract_strided_slice %0 {offsets = [32, 0], sizes = [4, 32], strides = [1, 1]} : vector<120x32xf32> to vector<4x32xf32>
    %3 = vector.extract_strided_slice %0 {offsets = [40, 0], sizes = [32, 32], strides = [1, 1]} : vector<120x32xf32> to vector<32x32xf32>
    %4 = vector.extract_strided_slice %0 {offsets = [72, 0], sizes = [1, 32], strides = [1, 1]} : vector<120x32xf32> to vector<1x32xf32>
    %5 = vector.extract_strided_slice %0 {offsets = [80, 0], sizes = [32, 16], strides = [1, 1]} : vector<120x32xf32> to vector<32x16xf32>
    %6 = vector.extract_strided_slice %0 {offsets = [112, 0], sizes = [1, 16], strides = [1, 1]} : vector<120x32xf32> to vector<1x16xf32>
    %c0_1 = arith.constant 0 : index
    %c0_2 = arith.constant 0 : index
    %7 = vector.load %arg2[%c0_1, %c0_2] : memref<8x1024xf32, #tpu.memory_space<vmem>>, vector<8x1024xf32>
    %c0_3 = arith.constant 0 : index
    %c0_4 = arith.constant 0 : index
    %8 = vector.load %arg3[%c0_3, %c0_4] : memref<8x8xi32, #tpu.memory_space<vmem>>, vector<8x8xi32>
    %cst = arith.constant 0.000000e+00 : f32
    %9 = vector.broadcast %cst : f32 to vector<8x32xf32>
    %10 = vector.extract_strided_slice %7 {offsets = [0, 0], sizes = [8, 256], strides = [1, 1]} : vector<8x1024xf32> to vector<8x256xf32>
    %cst_5 = arith.constant dense<0.000000e+00> : vector<8xf32>
    %11 = vector.multi_reduction <add>, %10, %cst_5 [1] : vector<8x256xf32> to vector<8xf32>
    %12 = vector.shape_cast %11 : vector<8xf32> to vector<8x1xf32>
    %cst_6 = arith.constant 3.906250e-03 : f32
    %13 = vector.broadcast %cst_6 : f32 to vector<8x1xf32>
    %14 = arith.mulf %12, %13 : vector<8x1xf32>
    %15 = vector.extract_strided_slice %2 {offsets = [0, 0], sizes = [1, 32], strides = [1, 1]} : vector<4x32xf32> to vector<1x32xf32>
    %16 = vector.broadcast %14 : vector<8x1xf32> to vector<8x32xf32>
    %17 = vector.broadcast %15 : vector<1x32xf32> to vector<8x32xf32>
    %18 = arith.mulf %16, %17 : vector<8x32xf32>
    %19 = arith.addf %9, %18 : vector<8x32xf32>
    %20 = vector.extract_strided_slice %7 {offsets = [0, 256], sizes = [8, 256], strides = [1, 1]} : vector<8x1024xf32> to vector<8x256xf32>
    %cst_7 = arith.constant dense<0.000000e+00> : vector<8xf32>
    %21 = vector.multi_reduction <add>, %20, %cst_7 [1] : vector<8x256xf32> to vector<8xf32>
    %22 = vector.shape_cast %21 : vector<8xf32> to vector<8x1xf32>
    %cst_8 = arith.constant 3.906250e-03 : f32
    %23 = vector.broadcast %cst_8 : f32 to vector<8x1xf32>
    %24 = arith.mulf %22, %23 : vector<8x1xf32>
    %25 = vector.extract_strided_slice %2 {offsets = [1, 0], sizes = [1, 32], strides = [1, 1]} : vector<4x32xf32> to vector<1x32xf32>
    %26 = vector.broadcast %24 : vector<8x1xf32> to vector<8x32xf32>
    %27 = vector.broadcast %25 : vector<1x32xf32> to vector<8x32xf32>
    %28 = arith.mulf %26, %27 : vector<8x32xf32>
    %29 = arith.addf %19, %28 : vector<8x32xf32>
    %30 = vector.extract_strided_slice %7 {offsets = [0, 512], sizes = [8, 256], strides = [1, 1]} : vector<8x1024xf32> to vector<8x256xf32>
    %cst_9 = arith.constant dense<0.000000e+00> : vector<8xf32>
    %31 = vector.multi_reduction <add>, %30, %cst_9 [1] : vector<8x256xf32> to vector<8xf32>
    %32 = vector.shape_cast %31 : vector<8xf32> to vector<8x1xf32>
    %cst_10 = arith.constant 3.906250e-03 : f32
    %33 = vector.broadcast %cst_10 : f32 to vector<8x1xf32>
    %34 = arith.mulf %32, %33 : vector<8x1xf32>
    %35 = vector.extract_strided_slice %2 {offsets = [2, 0], sizes = [1, 32], strides = [1, 1]} : vector<4x32xf32> to vector<1x32xf32>
    %36 = vector.broadcast %34 : vector<8x1xf32> to vector<8x32xf32>
    %37 = vector.broadcast %35 : vector<1x32xf32> to vector<8x32xf32>
    %38 = arith.mulf %36, %37 : vector<8x32xf32>
    %39 = arith.addf %29, %38 : vector<8x32xf32>
    %40 = vector.extract_strided_slice %7 {offsets = [0, 768], sizes = [8, 256], strides = [1, 1]} : vector<8x1024xf32> to vector<8x256xf32>
    %cst_11 = arith.constant dense<0.000000e+00> : vector<8xf32>
    %41 = vector.multi_reduction <add>, %40, %cst_11 [1] : vector<8x256xf32> to vector<8xf32>
    %42 = vector.shape_cast %41 : vector<8xf32> to vector<8x1xf32>
    %cst_12 = arith.constant 3.906250e-03 : f32
    %43 = vector.broadcast %cst_12 : f32 to vector<8x1xf32>
    %44 = arith.mulf %42, %43 : vector<8x1xf32>
    %45 = vector.extract_strided_slice %2 {offsets = [3, 0], sizes = [1, 32], strides = [1, 1]} : vector<4x32xf32> to vector<1x32xf32>
    %46 = vector.broadcast %44 : vector<8x1xf32> to vector<8x32xf32>
    %47 = vector.broadcast %45 : vector<1x32xf32> to vector<8x32xf32>
    %48 = arith.mulf %46, %47 : vector<8x32xf32>
    %49 = arith.addf %39, %48 : vector<8x32xf32>
    %50 = tpu.iota {dimensions = array<i32: 1>} : vector<8x32xi32>
    %cst_13 = arith.constant 0.000000e+00 : f32
    %51 = vector.broadcast %cst_13 : f32 to vector<8x32xf32>
    %52 = vector.extract_strided_slice %8 {offsets = [0, 0], sizes = [8, 1], strides = [1, 1]} : vector<8x8xi32> to vector<8x1xi32>
    %53 = vector.broadcast %52 : vector<8x1xi32> to vector<8x32xi32>
    %54 = arith.cmpi eq, %50, %53 : vector<8x32xi32>
    %55 = arith.extui %54 : vector<8x32xi1> to vector<8x32xi32>
    %56 = arith.sitofp %55 : vector<8x32xi32> to vector<8x32xf32>
    %57 = arith.addf %51, %56 : vector<8x32xf32>
    %58 = vector.extract_strided_slice %8 {offsets = [0, 1], sizes = [8, 1], strides = [1, 1]} : vector<8x8xi32> to vector<8x1xi32>
    %59 = vector.broadcast %58 : vector<8x1xi32> to vector<8x32xi32>
    %60 = arith.cmpi eq, %50, %59 : vector<8x32xi32>
    %61 = arith.extui %60 : vector<8x32xi1> to vector<8x32xi32>
    %62 = arith.sitofp %61 : vector<8x32xi32> to vector<8x32xf32>
    %63 = arith.addf %57, %62 : vector<8x32xf32>
    %64 = vector.extract_strided_slice %8 {offsets = [0, 2], sizes = [8, 1], strides = [1, 1]} : vector<8x8xi32> to vector<8x1xi32>
    %65 = vector.broadcast %64 : vector<8x1xi32> to vector<8x32xi32>
    %66 = arith.cmpi eq, %50, %65 : vector<8x32xi32>
    %67 = arith.extui %66 : vector<8x32xi1> to vector<8x32xi32>
    %68 = arith.sitofp %67 : vector<8x32xi32> to vector<8x32xf32>
    %69 = arith.addf %63, %68 : vector<8x32xf32>
    %70 = vector.extract_strided_slice %8 {offsets = [0, 3], sizes = [8, 1], strides = [1, 1]} : vector<8x8xi32> to vector<8x1xi32>
    %71 = vector.broadcast %70 : vector<8x1xi32> to vector<8x32xi32>
    %72 = arith.cmpi eq, %50, %71 : vector<8x32xi32>
    %73 = arith.extui %72 : vector<8x32xi1> to vector<8x32xi32>
    %74 = arith.sitofp %73 : vector<8x32xi32> to vector<8x32xf32>
    %75 = arith.addf %69, %74 : vector<8x32xf32>
    %76 = vector.extract_strided_slice %8 {offsets = [0, 4], sizes = [8, 1], strides = [1, 1]} : vector<8x8xi32> to vector<8x1xi32>
    %77 = vector.broadcast %76 : vector<8x1xi32> to vector<8x32xi32>
    %78 = arith.cmpi eq, %50, %77 : vector<8x32xi32>
    %79 = arith.extui %78 : vector<8x32xi1> to vector<8x32xi32>
    %80 = arith.sitofp %79 : vector<8x32xi32> to vector<8x32xf32>
    %81 = arith.addf %75, %80 : vector<8x32xf32>
    %82 = vector.extract_strided_slice %8 {offsets = [0, 5], sizes = [8, 1], strides = [1, 1]} : vector<8x8xi32> to vector<8x1xi32>
    %83 = vector.broadcast %82 : vector<8x1xi32> to vector<8x32xi32>
    %84 = arith.cmpi eq, %50, %83 : vector<8x32xi32>
    %85 = arith.extui %84 : vector<8x32xi1> to vector<8x32xi32>
    %86 = arith.sitofp %85 : vector<8x32xi32> to vector<8x32xf32>
    %87 = arith.addf %81, %86 : vector<8x32xf32>
    %88 = vector.extract_strided_slice %8 {offsets = [0, 6], sizes = [8, 1], strides = [1, 1]} : vector<8x8xi32> to vector<8x1xi32>
    %89 = vector.broadcast %88 : vector<8x1xi32> to vector<8x32xi32>
    %90 = arith.cmpi eq, %50, %89 : vector<8x32xi32>
    %91 = arith.extui %90 : vector<8x32xi1> to vector<8x32xi32>
    %92 = arith.sitofp %91 : vector<8x32xi32> to vector<8x32xf32>
    %93 = arith.addf %87, %92 : vector<8x32xf32>
    %94 = vector.extract_strided_slice %8 {offsets = [0, 7], sizes = [8, 1], strides = [1, 1]} : vector<8x8xi32> to vector<8x1xi32>
    %95 = vector.broadcast %94 : vector<8x1xi32> to vector<8x32xi32>
    %96 = arith.cmpi eq, %50, %95 : vector<8x32xi32>
    %97 = arith.extui %96 : vector<8x32xi1> to vector<8x32xi32>
    %98 = arith.sitofp %97 : vector<8x32xi32> to vector<8x32xf32>
    %99 = arith.addf %93, %98 : vector<8x32xf32>
    %cst_14 = arith.constant 1.250000e-01 : f32
    %100 = vector.broadcast %cst_14 : f32 to vector<8x32xf32>
    %101 = arith.mulf %99, %100 : vector<8x32xf32>
    %cst_15 = arith.constant dense<0.000000e+00> : vector<8x32xf32>
    %102 = tpu.matmul %101, %1, %cst_15 {dimension_numbers = #tpu.dot_dimension_numbers<[1], [0], [0], [1], [0, 0, 1, 1], [], []>} : vector<8x32xf32>, vector<32x32xf32>, vector<8x32xf32> -> vector<8x32xf32>
    %103 = arith.mulf %49, %102 : vector<8x32xf32>
    %cst_16 = arith.constant dense<0.000000e+00> : vector<8x32xf32>
    %104 = tpu.matmul %103, %3, %cst_16 {dimension_numbers = #tpu.dot_dimension_numbers<[1], [0], [0], [1], [0, 0, 1, 1], [], []>} : vector<8x32xf32>, vector<32x32xf32>, vector<8x32xf32> -> vector<8x32xf32>
    %105 = vector.broadcast %4 : vector<1x32xf32> to vector<8x32xf32>
    %106 = arith.addf %104, %105 : vector<8x32xf32>
    %cst_17 = arith.constant 0.000000e+00 : f32
    %107 = vector.broadcast %cst_17 : f32 to vector<8x32xf32>
    %108 = arith.maximumf %106, %107 : vector<8x32xf32>
    %cst_18 = arith.constant dense<0.000000e+00> : vector<8x16xf32>
    %109 = tpu.matmul %108, %5, %cst_18 {dimension_numbers = #tpu.dot_dimension_numbers<[1], [0], [0], [1], [0, 0, 1, 1], [], []>} : vector<8x32xf32>, vector<32x16xf32>, vector<8x16xf32> -> vector<8x16xf32>
    %110 = vector.broadcast %6 : vector<1x16xf32> to vector<8x16xf32>
    %111 = arith.addf %109, %110 : vector<8x16xf32>
    %c0_19 = arith.constant 0 : index
    %c0_20 = arith.constant 0 : index
    %112 = vector.load %arg4[%c0_19, %c0_20] : memref<8x16xf32, #tpu.memory_space<vmem>>, vector<8x16xf32>
    tpu.vector_store %arg4[%c0_19, %c0_20], %111 {strides = array<i32>} : memref<8x16xf32, #tpu.memory_space<vmem>>, vector<8x16xf32>,
    return
  }
  func.func @transform_0(%arg0: i32) -> (i32, i32) {
    %c0_i32 = arith.constant 0 : i32
    %c0_i32_0 = arith.constant 0 : i32
    %c0_i32_1 = arith.constant 0 : i32
    return %c0_i32, %c0_i32_0 : i32, i32
  }
  func.func @transform_1(%arg0: i32) -> (i32, i32) {
    %c0_i32 = arith.constant 0 : i32
    %c0_i32_0 = arith.constant 0 : i32
    return %arg0, %c0_i32 : i32, i32
  }
  func.func @transform_2(%arg0: i32) -> (i32, i32) {
    %c0_i32 = arith.constant 0 : i32
    %c0_i32_0 = arith.constant 0 : i32
    return %arg0, %c0_i32 : i32, i32
  }
  func.func @transform_3(%arg0: i32) -> (i32, i32) {
    %c0_i32 = arith.constant 0 : i32
    %c0_i32_0 = arith.constant 0 : i32
    return %arg0, %c0_i32 : i32, i32
  }
}

</mosaic_0001>

<llo_original>
// kernel: tpu_custom_call.1
$region0: #{tpu_custom_call.1}
  #allocation0 [shape = 'u32[]', space=smem, size = 0x4, offset = 0x4, fixed_abs, tag = 'smem constant byte address 0x4 - core index']
  #allocation1 [shape = 'u32[144,128]{1,0:T(1,128)}', space=vmem, size = 0x12000, scoped, tag = 'internal scratch']
  %s0 = inlined_call_operand.vmem [shape: f32[120,32], index: 0, kind: input, shape index: {}]
  %s1 = inlined_call_operand.vmem [shape: f32[8,1024], index: 1, kind: input, shape index: {}]
  %s2 = inlined_call_operand.vmem [shape: s32[8,8], index: 2, kind: input, shape index: {}]
  %s3 = inlined_call_operand.hbm [shape: f32[8,16], index: 3, kind: output, shape index: {}]
  %s4 = sld [smem:[#allocation0]]
  $region22: #{tpu_custom_call.1} parent=0
    _
  %s6 = ssub.s32 1, %s4
  %s7 = scalar_select 0, %s6, %s4
  $region1: #{tpu_custom_call.1} parent=0
    #allocation2 [shape = 'u8[4096]{0}', space=vmem, size = 0x1000, scoped, tag = 'output window, operand 0, single buffered']
    #allocation3 [shape = 's32[1]{0}', space=sflag, size = 0x4, scoped, tag = 'scoped memory for tpu_custom_call.1']
    %8 = vsyncpa [#allocation3], 0
    // Predicated region
    $region2: #{tpu_custom_call.1} parent=1 // pred_check
      _
    $region3: #{tpu_custom_call.1} parent=1 // pred_check_branch
      %10 = sbr.rel (0) target = $region5
    $region4: #{tpu_custom_call.1} parent=1 // pred_region
      _
    $region5: #{tpu_custom_call.1} parent=1 // pred_fallthru
      _
    // Predicated region
    $region6: #{tpu_custom_call.1} parent=1 // pred_check
      _
    $region7: #{tpu_custom_call.1} parent=1 // pred_check_branch
      %12 = sbr.rel (0) target = $region9
    $region8: #{tpu_custom_call.1} parent=1 // pred_region
      _
    $region9: #{tpu_custom_call.1} parent=1 // pred_fallthru
      _
    // Predicated region
    $region10: #{tpu_custom_call.1} parent=1 // pred_check
      _
    $region11: #{tpu_custom_call.1} parent=1 // pred_check_branch
      %14 = sbr.rel (0) target = $region13
    $region12: #{tpu_custom_call.1} parent=1 // pred_region
      _
    $region13: #{tpu_custom_call.1} parent=1 // pred_fallthru
      _
    %v15 = vld [vmem:[%s0] sm:$0xff]
    %v16 = vld [vmem:[%s0 + $0x8] sm:$0xff]
    %v17 = vld [vmem:[%s0 + $0x10] sm:$0xff]
    %v18 = vld [vmem:[%s0 + $0x18] sm:$0xff]
    %v19 = vld [vmem:[%s0 + $0x20] sm:$0xff]
    %v20 = vld [vmem:[%s0 + $0x28] sm:$0xff]
    %v21 = vld [vmem:[%s0 + $0x30] sm:$0xff]
    %v22 = vld [vmem:[%s0 + $0x38] sm:$0xff]
    %v23 = vld [vmem:[%s0 + $0x40] sm:$0xff]
    %v24 = vld [vmem:[%s0 + $0x48] sm:$0xff]
    %v25 = vld [vmem:[%s0 + $0x50] sm:$0xff]
    %v26 = vld [vmem:[%s0 + $0x58] sm:$0xff]
    %v27 = vld [vmem:[%s0 + $0x60] sm:$0xff]
    %v28 = vld [vmem:[%s0 + $0x68] sm:$0xff]
    %v29 = vld [vmem:[%s0 + $0x70] sm:$0xff]
    %v30 = vld [vmem:[%s1] sm:$0xff]
    %v31 = vld [vmem:[%s1 + $0x8] sm:$0xff]
    %v32 = vld [vmem:[%s1 + $0x10] sm:$0xff]
    %v33 = vld [vmem:[%s1 + $0x18] sm:$0xff]
    %v34 = vld [vmem:[%s1 + $0x20] sm:$0xff]
    %v35 = vld [vmem:[%s1 + $0x28] sm:$0xff]
    %v36 = vld [vmem:[%s1 + $0x30] sm:$0xff]
    %v37 = vld [vmem:[%s1 + $0x38] sm:$0xff]
    %v38 = vld [vmem:[%s2] sm:$0xff]
    %v39 = vadd.f32 %v30, %v31
    %40 = vadd.xlane.f32.xlu0 %v39
    %v41 = vpop.xlane.xlu0 %40
    %v42 = vmul.f32 %v41, 0.00390625
    %v43 = vlaneseq
    %v44 = vshrl.u32 %v43, 7
    %v45 = vsub.s32 0, %v44
    %v46 = vrot.slane %v19, %v45
    %v47 = vmul.f32 %v42, %v46
    %v48 = vadd.f32 %v47, 0.0
    %v49 = vadd.f32 %v32, %v33
    %50 = vadd.xlane.f32.xlu0 %v49
    %v51 = vpop.xlane.xlu0 %50
    %v52 = vmul.f32 %v51, 0.00390625
    %v53 = vlaneseq
    %v54 = vshrl.u32 %v53, 7
    %v55 = vsub.s32 1, %v54
    %v56 = vrot.slane %v19, %v55
    %v57 = vmul.f32 %v52, %v56
    %v58 = vadd.f32 %v48, %v57
    %v59 = vadd.f32 %v34, %v35
    %60 = vadd.xlane.f32.xlu0 %v59
    %v61 = vpop.xlane.xlu0 %60
    %v62 = vmul.f32 %v61, 0.00390625
    %v63 = vlaneseq
    %v64 = vshrl.u32 %v63, 7
    %v65 = vsub.s32 2, %v64
    %v66 = vrot.slane %v19, %v65
    %v67 = vmul.f32 %v62, %v66
    %v68 = vadd.f32 %v58, %v67
    %v69 = vadd.f32 %v36, %v37
    %70 = vadd.xlane.f32.xlu0 %v69
    %v71 = vpop.xlane.xlu0 %70
    %v72 = vmul.f32 %v71, 0.00390625
    %v73 = vlaneseq
    %v74 = vshrl.u32 %v73, 7
    %v75 = vsub.s32 3, %v74
    %v76 = vrot.slane %v19, %v75
    %v77 = vmul.f32 %v72, %v76
    %v78 = vadd.f32 %v68, %v77
    %v79 = vlaneseq
    %v80 = vand.u32 %v79, 127
    %81 = vset.pattern.permute.xlu0 0
    %82 = vperm.xlu0 %81, %v38
    %v83 = vpop.permute.xlu0 %82
    %vm84 = vcmp.eq.s32.totalorder %v80, %v83
    %v85 = vsel %vm84, 1, 0
    %v86 = vcvt.s32.f32 %v85
    %v87 = vadd.f32 %v86, 0.0
    %88 = vset.pattern.permute.xlu0 1
    %89 = vperm.xlu0 %88, %v38
    %v90 = vpop.permute.xlu0 %89
    %vm91 = vcmp.eq.s32.totalorder %v80, %v90
    %v92 = vsel %vm91, 1, 0
    %v93 = vcvt.s32.f32 %v92
    %v94 = vadd.f32 %v87, %v93
    %95 = vset.pattern.permute.xlu0 2
    %96 = vperm.xlu0 %95, %v38
    %v97 = vpop.permute.xlu0 %96
    %vm98 = vcmp.eq.s32.totalorder %v80, %v97
    %v99 = vsel %vm98, 1, 0
    %v100 = vcvt.s32.f32 %v99
    %v101 = vadd.f32 %v94, %v100
    %102 = vset.pattern.permute.xlu0 3
    %103 = vperm.xlu0 %102, %v38
    %v104 = vpop.permute.xlu0 %103
    %vm105 = vcmp.eq.s32.totalorder %v80, %v104
    %v106 = vsel %vm105, 1, 0
    %v107 = vcvt.s32.f32 %v106
    %v108 = vadd.f32 %v101, %v107
    %109 = vset.pattern.permute.xlu0 4
    %110 = vperm.xlu0 %109, %v38
    %v111 = vpop.permute.xlu0 %110
    %vm112 = vcmp.eq.s32.totalorder %v80, %v111
    %v113 = vsel %vm112, 1, 0
    %v114 = vcvt.s32.f32 %v113
    %v115 = vadd.f32 %v108, %v114
    %116 = vset.pattern.permute.xlu0 5
    %117 = vperm.xlu0 %116, %v38
    %v118 = vpop.permute.xlu0 %117
    %vm119 = vcmp.eq.s32.totalorder %v80, %v118
    %v120 = vsel %vm119, 1, 0
    %v121 = vcvt.s32.f32 %v120
    %v122 = vadd.f32 %v115, %v121
    %123 = vset.pattern.permute.xlu0 6
    %124 = vperm.xlu0 %123, %v38
    %v125 = vpop.permute.xlu0 %124
    %vm126 = vcmp.eq.s32.totalorder %v80, %v125
    %v127 = vsel %vm126, 1, 0
    %v128 = vcvt.s32.f32 %v127
    %v129 = vadd.f32 %v122, %v128
    %130 = vset.pattern.permute.xlu0 7
    %131 = vperm.xlu0 %130, %v38
    %v132 = vpop.permute.xlu0 %131
    %vm133 = vcmp.eq.s32.totalorder %v80, %v132
    %v134 = vsel %vm133, 1, 0
    %v135 = vcvt.s32.f32 %v134
    %v136 = vadd.f32 %v129, %v135
    %v137 = vmul.f32 %v136, 0.125
    %vm138 = vcmask 261120
    %v140 = vsel %vm138, %v137, 0
    %142 = vmatprep.subr.mxu0 0.0
    %143 = vmatpush1.msra.mxu0 %v15
    %144 = vmatprep.subr.mxu0 0.0
    %145 = vmatpush1.msra.mxu0 %v16
    %146 = vmatprep.subr.mxu0 0.0
    %147 = vmatpush1.msra.mxu0 %v17
    %148 = vmatprep.subr.mxu0 0.0
    %149 = vmatpush1.msra.mxu0 %v18
    %150 = vmatprep.subr.mxu0 0.0
    %151 = vmatpush1.msra.mxu0 0.0
    %152 = vmatprep.subr.mxu0 0.0
    %153 = vmatpush1.msra.mxu0 0.0
    %154 = vmatprep.subr.mxu0 0.0
    %155 = vmatpush1.msra.mxu0 0.0
    %156 = vmatprep.subr.mxu0 0.0
    %157 = vmatpush1.msra.mxu0 0.0
    %158 = vmatprep.subr.mxu0 0.0
    %159 = vmatpush1.msra.mxu0 0.0
    %160 = vmatprep.subr.mxu0 0.0
    %161 = vmatpush1.msra.mxu0 0.0
    %162 = vmatprep.subr.mxu0 0.0
    %163 = vmatpush1.msra.mxu0 0.0
    %164 = vmatprep.subr.mxu0 0.0
    %165 = vmatpush1.msra.mxu0 0.0
    %166 = vmatprep.subr.mxu0 0.0
    %167 = vmatpush1.msra.mxu0 0.0
    %168 = vmatprep.subr.mxu0 0.0
    %169 = vmatpush1.msra.mxu0 0.0
    %170 = vmatprep.subr.mxu0 0.0
    %171 = vmatpush1.msra.mxu0 0.0
    %172 = vmatprep.subr.mxu0 0.0
    %173 = vmatpush1.msra.mxu0 0.0
    %174 = vmatprep.subr.mxu0 0.0
    %175 = vmatpush1.msra.mxu0 0.0
    %176 = vmatprep.subr.mxu0 0.0
    %177 = vmatpush1.msra.mxu0 0.0
    %178 = vmatprep.subr.mxu0 0.0
    %179 = vmatpush1.msra.mxu0 0.0
    %180 = vmatprep.subr.mxu0 0.0
    %181 = vmatpush1.msra.mxu0 0.0
    %182 = vmatprep.subr.mxu0 0.0
    %183 = vmatpush1.msra.mxu0 0.0
    %184 = vmatprep.subr.mxu0 0.0
    %185 = vmatpush1.msra.mxu0 0.0
    %186 = vmatprep.subr.mxu0 0.0
    %187 = vmatpush1.msra.mxu0 0.0
    %188 = vmatprep.subr.mxu0 0.0
    %189 = vmatpush1.msra.mxu0 0.0
    %190 = vmatprep.subr.mxu0 0.0
    %191 = vmatpush1.msra.mxu0 0.0
    %192 = vmatprep.subr.mxu0 0.0
    %193 = vmatpush1.msra.mxu0 0.0
    %194 = vmatprep.subr.mxu0 0.0
    %195 = vmatpush1.msra.mxu0 0.0
    %196 = vmatprep.subr.mxu0 0.0
    %197 = vmatpush1.msra.mxu0 0.0
    %198 = vmatprep.subr.mxu0 0.0
    %199 = vmatpush1.msra.mxu0 0.0
    %200 = vmatprep.subr.mxu0 0.0
    %201 = vmatpush1.msra.mxu0 0.0
    %202 = vmatprep.subr.mxu0 0.0
    %203 = vmatpush1.msra.mxu0 0.0
    %204 = vmatprep.subr.mxu0 0.0
    %205 = vmatpush1.msra.mxu0 0.0
    %206 = vmatprep.mubr.f32.mxu0 0.0
    %207 = vmatmul.mubr.f32.gmra.mrb[0].mxu0 %v140
    %v208 = vpop.f32.mrb[0].mxu0
    %v209 = vadd.f32 0.0, %v208
    %v210 = vpop.f32.mrb[0].mxu0
    %211 = vdwg.mxu0
    %v212 = vmul.f32 %v78, %v209
    %v213 = vlaneseq
    %v214 = vshrl.u32 %v213, 7
    %v215 = vsub.s32 0, %v214
    %v216 = vrot.slane %v24, %v215
    %v218 = vsel %vm138, %v212, 0
    %220 = vmatprep.subr.mxu0 0.0
    %221 = vmatpush1.msra.mxu0 %v20
    %222 = vmatprep.subr.mxu0 0.0
    %223 = vmatpush1.msra.mxu0 %v21
    %224 = vmatprep.subr.mxu0 0.0
    %225 = vmatpush1.msra.mxu0 %v22
    %226 = vmatprep.subr.mxu0 0.0
    %227 = vmatpush1.msra.mxu0 %v23
    %228 = vmatprep.subr.mxu0 0.0
    %229 = vmatpush1.msra.mxu0 0.0
    %230 = vmatprep.subr.mxu0 0.0
    %231 = vmatpush1.msra.mxu0 0.0
    %232 = vmatprep.subr.mxu0 0.0
    %233 = vmatpush1.msra.mxu0 0.0
    %234 = vmatprep.subr.mxu0 0.0
    %235 = vmatpush1.msra.mxu0 0.0
    %236 = vmatprep.subr.mxu0 0.0
    %237 = vmatpush1.msra.mxu0 0.0
    %238 = vmatprep.subr.mxu0 0.0
    %239 = vmatpush1.msra.mxu0 0.0
    %240 = vmatprep.subr.mxu0 0.0
    %241 = vmatpush1.msra.mxu0 0.0
    %242 = vmatprep.subr.mxu0 0.0
    %243 = vmatpush1.msra.mxu0 0.0
    %244 = vmatprep.subr.mxu0 0.0
    %245 = vmatpush1.msra.mxu0 0.0
    %246 = vmatprep.subr.mxu0 0.0
    %247 = vmatpush1.msra.mxu0 0.0
    %248 = vmatprep.subr.mxu0 0.0
    %249 = vmatpush1.msra.mxu0 0.0
    %250 = vmatprep.subr.mxu0 0.0
    %251 = vmatpush1.msra.mxu0 0.0
    %252 = vmatprep.subr.mxu0 0.0
    %253 = vmatpush1.msra.mxu0 0.0
    %254 = vmatprep.subr.mxu0 0.0
    %255 = vmatpush1.msra.mxu0 0.0
    %256 = vmatprep.subr.mxu0 0.0
    %257 = vmatpush1.msra.mxu0 0.0
    %258 = vmatprep.subr.mxu0 0.0
    %259 = vmatpush1.msra.mxu0 0.0
    %260 = vmatprep.subr.mxu0 0.0
    %261 = vmatpush1.msra.mxu0 0.0
    %262 = vmatprep.subr.mxu0 0.0
    %263 = vmatpush1.msra.mxu0 0.0
    %264 = vmatprep.subr.mxu0 0.0
    %265 = vmatpush1.msra.mxu0 0.0
    %266 = vmatprep.subr.mxu0 0.0
    %267 = vmatpush1.msra.mxu0 0.0
    %268 = vmatprep.subr.mxu0 0.0
    %269 = vmatpush1.msra.mxu0 0.0
    %270 = vmatprep.subr.mxu0 0.0
    %271 = vmatpush1.msra.mxu0 0.0
    %272 = vmatprep.subr.mxu0 0.0
    %273 = vmatpush1.msra.mxu0 0.0
    %274 = vmatprep.subr.mxu0 0.0
    %275 = vmatpush1.msra.mxu0 0.0
    %276 = vmatprep.subr.mxu0 0.0
    %277 = vmatpush1.msra.mxu0 0.0
    %278 = vmatprep.subr.mxu0 0.0
    %279 = vmatpush1.msra.mxu0 0.0
    %280 = vmatprep.subr.mxu0 0.0
    %281 = vmatpush1.msra.mxu0 0.0
    %282 = vmatprep.subr.mxu0 0.0
    %283 = vmatpush1.msra.mxu0 0.0
    %284 = vmatprep.mubr.f32.mxu0 0.0
    %285 = vmatmul.mubr.f32.gmra.mrb[0].mxu0 %v218
    %v286 = vpop.f32.mrb[0].mxu0
    %v287 = vadd.f32 %v216, %v286
    %v288 = vpop.f32.mrb[0].mxu0
    %289 = vdwg.mxu0
    %v290 = vmax.f32 %v287, 0.0
    %v291 = vlaneseq
    %v292 = vshrl.u32 %v291, 7
    %v293 = vsub.s32 0, %v292
    %v294 = vrot.slane %v29, %v293
    %v296 = vsel %vm138, %v290, 0
    %298 = vmatprep.subr.mxu0 0.0
    %299 = vmatpush1.msra.mxu0 %v25
    %300 = vmatprep.subr.mxu0 0.0
    %301 = vmatpush1.msra.mxu0 %v26
    %302 = vmatprep.subr.mxu0 0.0
    %303 = vmatpush1.msra.mxu0 %v27
    %304 = vmatprep.subr.mxu0 0.0
    %305 = vmatpush1.msra.mxu0 %v28
    %306 = vmatprep.subr.mxu0 0.0
    %307 = vmatpush1.msra.mxu0 0.0
    %308 = vmatprep.subr.mxu0 0.0
    %309 = vmatpush1.msra.mxu0 0.0
    %310 = vmatprep.subr.mxu0 0.0
    %311 = vmatpush1.msra.mxu0 0.0
    %312 = vmatprep.subr.mxu0 0.0
    %313 = vmatpush1.msra.mxu0 0.0
    %314 = vmatprep.subr.mxu0 0.0
    %315 = vmatpush1.msra.mxu0 0.0
    %316 = vmatprep.subr.mxu0 0.0
    %317 = vmatpush1.msra.mxu0 0.0
    %318 = vmatprep.subr.mxu0 0.0
    %319 = vmatpush1.msra.mxu0 0.0
    %320 = vmatprep.subr.mxu0 0.0
    %321 = vmatpush1.msra.mxu0 0.0
    %322 = vmatprep.subr.mxu0 0.0
    %323 = vmatpush1.msra.mxu0 0.0
    %324 = vmatprep.subr.mxu0 0.0
    %325 = vmatpush1.msra.mxu0 0.0
    %326 = vmatprep.subr.mxu0 0.0
    %327 = vmatpush1.msra.mxu0 0.0
    %328 = vmatprep.subr.mxu0 0.0
    %329 = vmatpush1.msra.mxu0 0.0
    %330 = vmatprep.subr.mxu0 0.0
    %331 = vmatpush1.msra.mxu0 0.0
    %332 = vmatprep.subr.mxu0 0.0
    %333 = vmatpush1.msra.mxu0 0.0
    %334 = vmatprep.subr.mxu0 0.0
    %335 = vmatpush1.msra.mxu0 0.0
    %336 = vmatprep.subr.mxu0 0.0
    %337 = vmatpush1.msra.mxu0 0.0
    %338 = vmatprep.subr.mxu0 0.0
    %339 = vmatpush1.msra.mxu0 0.0
    %340 = vmatprep.subr.mxu0 0.0
    %341 = vmatpush1.msra.mxu0 0.0
    %342 = vmatprep.subr.mxu0 0.0
    %343 = vmatpush1.msra.mxu0 0.0
    %344 = vmatprep.subr.mxu0 0.0
    %345 = vmatpush1.msra.mxu0 0.0
    %346 = vmatprep.subr.mxu0 0.0
    %347 = vmatpush1.msra.mxu0 0.0
    %348 = vmatprep.subr.mxu0 0.0
    %349 = vmatpush1.msra.mxu0 0.0
    %350 = vmatprep.subr.mxu0 0.0
    %351 = vmatpush1.msra.mxu0 0.0
    %352 = vmatprep.subr.mxu0 0.0
    %353 = vmatpush1.msra.mxu0 0.0
    %354 = vmatprep.subr.mxu0 0.0
    %355 = vmatpush1.msra.mxu0 0.0
    %356 = vmatprep.subr.mxu0 0.0
    %357 = vmatpush1.msra.mxu0 0.0
    %358 = vmatprep.subr.mxu0 0.0
    %359 = vmatpush1.msra.mxu0 0.0
    %360 = vmatprep.subr.mxu0 0.0
    %361 = vmatpush1.msra.mxu0 0.0
    %362 = vmatprep.mubr.f32.mxu0 0.0
    %363 = vmatmul.mubr.f32.gmra.mrb[0].mxu0 %v296
    %v364 = vpop.f32.mrb[0].mxu0
    %v365 = vadd.f32 %v294, %v364
    %v366 = vpop.f32.mrb[0].mxu0
    %367 = vdwg.mxu0
    %vm368 = vcmask 130048
    %369 = vst.msk [vmem:[#allocation2] sm:$0xff] %vm368, %v365
    // Predicated region
    $region14: #{tpu_custom_call.1} parent=1 // pred_check
      _
    $region15: #{tpu_custom_call.1} parent=1 // pred_check_branch
      %371 = sbr.rel (0) target = $region17
    $region16: #{tpu_custom_call.1} parent=1 // pred_region
      %s373 = ssub.s32 128, 128
      %374 = vsyncadd [#allocation3], %s373
      %s376 = sshll.u32 [#allocation2], 4
      %s377 = int_to_ptr.vmem [resolvable:$true] %s376
      %379 = dma.vmem_to_hbm [thread:$0]  %s377, 128, %s3, [#allocation3]
    $region17: #{tpu_custom_call.1} parent=1 // pred_fallthru
      _
    // Predicated region
    $region18: #{tpu_custom_call.1} parent=1 // pred_check
      _
    $region19: #{tpu_custom_call.1} parent=1 // pred_check_branch
      %381 = sbr.rel (0) target = $region21
    $region20: #{tpu_custom_call.1} parent=1 // pred_region
      %382 = dma.done [#allocation3], 128
    $region21: #{tpu_custom_call.1} parent=1 // pred_fallthru
      _
    %383 = vsyncpa [#allocation3], 1

</llo_original>
